<compile_context>
chip_gen: v5e
topology: v5e:2x2
jax: 0.10.0
libtpu: 0.0.40
codegen_flags: <defaults>
</compile_context>

<pallas_src>
import jax
import jax.numpy as jnp
from jax.experimental import pallas as pl
from jax.experimental.pallas import tpu as pltpu

LANE = 128


def _round_up(n, m):
    return ((n + m - 1) // m) * m


def _pad2(a, rows, cols):
    r, c = a.shape
    return jnp.pad(a, ((0, rows - r), (0, cols - c)))


# ---------------------------------------------------------------------------
# Fused MLP kernel: one grid step = one batch tile, all layers in VMEM/vregs.
# ---------------------------------------------------------------------------

def _make_fused_mlp_kernel(n_hidden):
    """Builds a kernel for (in_layer, n_hidden hidden layers, out_layer)."""

    def kernel(x_ref, *refs):
        wb_refs = refs[:-1]          # w0, b0, w1, b1, ..., wL, bL
        o_ref = refs[-1]
        w_refs = wb_refs[0::2]
        b_refs = wb_refs[1::2]

        # in_layer + ReLU (accumulate in f32 on the MXU, epilogue in f32)
        x = x_ref[...].astype(jnp.float32)
        x = jnp.maximum(
            jnp.dot(x, w_refs[0][...], preferred_element_type=jnp.float32)
            + b_refs[0][...],
            0.0,
        )

        residual = x
        for idx in range(n_hidden):
            w = w_refs[1 + idx][...]
            b = b_refs[1 + idx][...]
            y = jnp.dot(x, w, preferred_element_type=jnp.float32) + b
            if idx % 2 == 0:
                residual = x                      # residual = input of this layer
                x = jnp.maximum(y, 0.0)           # nonlin(layer(x))
            else:
                x = jnp.maximum(residual + y, 0.0)  # nonlin(residual + layer(x))

        # out_layer (no nonlinearity)
        y = (jnp.dot(x, w_refs[-1][...], preferred_element_type=jnp.float32)
             + b_refs[-1][...])
        o_ref[...] = y.astype(o_ref.dtype)

    return kernel


def mlp_forward(x, in_layer, hidden_layers, out_layer, *, tm=None):
    """Pallas-backed fused forward pass.  x: (batch, in_dim)."""
    layers = [in_layer] + list(hidden_layers) + [out_layer]
    M, in_dim = x.shape
    out_dim = layers[-1][0].shape[1]
    n_hidden = len(hidden_layers)

    # Lane-dense padding of every feature dimension to a multiple of 128.
    dims = [in_dim] + [w.shape[1] for (w, _) in layers]
    dims_pad = [_round_up(d, LANE) for d in dims]

    # Batch tiling: big tiles, multiple of 8 sublanes; pad batch to tile.
    if tm is None:
        tm = 128 if M >= 128 else _round_up(M, 8)
    m_pad = _round_up(M, tm)

    x_p = jnp.pad(x, ((0, m_pad - M), (0, dims_pad[0] - in_dim)))

    padded_params = []
    for li, (w, b) in enumerate(layers):
        padded_params.append(_pad2(w, dims_pad[li], dims_pad[li + 1]))
        padded_params.append(_pad2(b.reshape(1, -1), 1, dims_pad[li + 1]))

    in_specs = [pl.BlockSpec((tm, dims_pad[0]), lambda i: (i, 0))]
    for li in range(len(layers)):
        din_p, dout_p = dims_pad[li], dims_pad[li + 1]
        in_specs.append(pl.BlockSpec((din_p, dout_p), lambda i: (0, 0)))   # weight
        in_specs.append(pl.BlockSpec((1, dout_p), lambda i: (0, 0)))       # bias

    out_pad = dims_pad[-1]
    out = pl.pallas_call(
        _make_fused_mlp_kernel(n_hidden),
        out_shape=jax.ShapeDtypeStruct((m_pad, out_pad), x.dtype),
        grid_spec=pltpu.PrefetchScalarGridSpec(
            num_scalar_prefetch=0,
            grid=(m_pad // tm,),
            in_specs=in_specs,
            out_specs=pl.BlockSpec((tm, out_pad), lambda i: (i, 0)),
        ),
        compiler_params=pltpu.CompilerParams(
            dimension_semantics=("parallel",)),
    )(x_p, *padded_params)

    return out[:M, :out_dim]


# ---------------------------------------------------------------------------
# Parameter init + pure-JAX reference
# ---------------------------------------------------------------------------

def init_mlp_params(key, in_dim, sizes, out_dim, dtype=jnp.float32):
    """Deterministic init. Weights stored as (in_features, out_features)."""
    dims = [(in_dim, sizes[0])] + \
           [(sizes[i], sizes[i + 1]) for i in range(len(sizes) - 1)] + \
           [(sizes[-1], out_dim)]
    params = []
    for (din, dout) in dims:
        key, kw, kb = jax.random.split(key, 3)
        scale = 1.0 / jnp.sqrt(jnp.asarray(din, dtype))
        w = jax.random.uniform(kw, (din, dout), dtype, -scale, scale)
        b = jax.random.uniform(kb, (1, dout), dtype, -scale, scale)
        params.append((w, b))
    return params[0], params[1:-1], params[-1]


def mlp_forward_ref(x, in_layer, hidden_layers, out_layer):
    """Pure-JAX reference for validation."""
    relu = lambda v: jnp.maximum(v, 0.0)
    w, b = in_layer
    x = relu(x @ w + b)
    residual = x
    for index, (w, b) in enumerate(hidden_layers):
        if index % 2 == 0:
            residual = x
            x = relu(x @ w + b)
        else:
            x = relu(residual + x @ w + b)
    w, b = out_layer
    return x @ w + b


if __name__ == "__main__":
    # in_dim=16, sizes=[32,32,32,32], out_dim=8, nonlin=ReLU.
    # batch=200 -> padded to 2 tiles of 128 (exercises batch padding and gives
    # both TensorCores work on v7x).
    batch, in_dim, out_dim = 200, 16, 8
    sizes = [32, 32, 32, 32]

    key = jax.random.PRNGKey(0)
    key, kx = jax.random.split(key)
    x = jax.random.normal(kx, (batch, in_dim), jnp.float32)

    in_layer, hidden_layers, out_layer = init_mlp_params(key, in_dim, sizes, out_dim)

    out = mlp_forward(x, in_layer, hidden_layers, out_layer)
    out = jax.block_until_ready(out)

    ref = mlp_forward_ref(x, in_layer, hidden_layers, out_layer)
    assert out.shape == (batch, out_dim)
    assert jnp.allclose(out, ref, atol=1e-5, rtol=1e-5), "Pallas output mismatch vs reference"

    print("KERNEL_OK")
</pallas_src>

<mosaic_0001>
module attributes {stable_mosaic.version = 11 : i64} {
  func.func @kernel(%arg0: i32, %arg1: memref<128x128xf32, #tpu.memory_space<vmem>>, %arg2: memref<128x128xf32, #tpu.memory_space<vmem>>, %arg3: memref<1x128xf32, #tpu.memory_space<vmem>>, %arg4: memref<128x128xf32, #tpu.memory_space<vmem>>, %arg5: memref<1x128xf32, #tpu.memory_space<vmem>>, %arg6: memref<128x128xf32, #tpu.memory_space<vmem>>, %arg7: memref<1x128xf32, #tpu.memory_space<vmem>>, %arg8: memref<128x128xf32, #tpu.memory_space<vmem>>, %arg9: memref<1x128xf32, #tpu.memory_space<vmem>>, %arg10: memref<128x128xf32, #tpu.memory_space<vmem>>, %arg11: memref<1x128xf32, #tpu.memory_space<vmem>>, %arg12: memref<128x128xf32, #tpu.memory_space<vmem>>) attributes {dimension_semantics = [#tpu.dimension_semantics<parallel>], iteration_bounds = array<i64: 2>, scalar_prefetch = 0 : i64, scratch_operands = 0 : i64, tpu.core_type = #tpu.core_type<tc>, window_params = [{transform_indices = @transform_0, window_bounds = array<i64: 128, 128>}, {pipeline_mode = #tpu.pipeline_mode<synchronous>, transform_indices = @transform_1, window_bounds = array<i64: 128, 128>}, {pipeline_mode = #tpu.pipeline_mode<synchronous>, transform_indices = @transform_2, window_bounds = array<i64: 1, 128>}, {pipeline_mode = #tpu.pipeline_mode<synchronous>, transform_indices = @transform_3, window_bounds = array<i64: 128, 128>}, {pipeline_mode = #tpu.pipeline_mode<synchronous>, transform_indices = @transform_4, window_bounds = array<i64: 1, 128>}, {pipeline_mode = #tpu.pipeline_mode<synchronous>, transform_indices = @transform_5, window_bounds = array<i64: 128, 128>}, {pipeline_mode = #tpu.pipeline_mode<synchronous>, transform_indices = @transform_6, window_bounds = array<i64: 1, 128>}, {pipeline_mode = #tpu.pipeline_mode<synchronous>, transform_indices = @transform_7, window_bounds = array<i64: 128, 128>}, {pipeline_mode = #tpu.pipeline_mode<synchronous>, transform_indices = @transform_8, window_bounds = array<i64: 1, 128>}, {pipeline_mode = #tpu.pipeline_mode<synchronous>, transform_indices = @transform_9, window_bounds = array<i64: 128, 128>}, {pipeline_mode = #tpu.pipeline_mode<synchronous>, transform_indices = @transform_10, window_bounds = array<i64: 1, 128>}, {transform_indices = @transform_11, window_bounds = array<i64: 128, 128>}]} {
    %c0 = arith.constant 0 : index
    %c0_0 = arith.constant 0 : index
    %0 = vector.load %arg1[%c0, %c0_0] : memref<128x128xf32, #tpu.memory_space<vmem>>, vector<128x128xf32>
    %c0_1 = arith.constant 0 : index
    %c0_2 = arith.constant 0 : index
    %1 = vector.load %arg2[%c0_1, %c0_2] : memref<128x128xf32, #tpu.memory_space<vmem>>, vector<128x128xf32>
    %cst = arith.constant dense<0.000000e+00> : vector<128x128xf32>
    %2 = tpu.matmul %0, %1, %cst {dimension_numbers = #tpu.dot_dimension_numbers<[1], [0], [0], [1], [0, 0, 1, 1], [], []>} : vector<128x128xf32>, vector<128x128xf32>, vector<128x128xf32> -> vector<128x128xf32>
    %c0_3 = arith.constant 0 : index
    %c0_4 = arith.constant 0 : index
    %3 = vector.load %arg3[%c0_3, %c0_4] : memref<1x128xf32, #tpu.memory_space<vmem>>, vector<1x128xf32>
    %4 = vector.broadcast %3 : vector<1x128xf32> to vector<128x128xf32>
    %5 = arith.addf %2, %4 : vector<128x128xf32>
    %cst_5 = arith.constant 0.000000e+00 : f32
    %6 = vector.broadcast %cst_5 : f32 to vector<128x128xf32>
    %7 = arith.maximumf %5, %6 : vector<128x128xf32>
    %c0_6 = arith.constant 0 : index
    %c0_7 = arith.constant 0 : index
    %8 = vector.load %arg4[%c0_6, %c0_7] : memref<128x128xf32, #tpu.memory_space<vmem>>, vector<128x128xf32>
    %c0_8 = arith.constant 0 : index
    %c0_9 = arith.constant 0 : index
    %9 = vector.load %arg5[%c0_8, %c0_9] : memref<1x128xf32, #tpu.memory_space<vmem>>, vector<1x128xf32>
    %cst_10 = arith.constant dense<0.000000e+00> : vector<128x128xf32>
    %10 = tpu.matmul %7, %8, %cst_10 {dimension_numbers = #tpu.dot_dimension_numbers<[1], [0], [0], [1], [0, 0, 1, 1], [], []>} : vector<128x128xf32>, vector<128x128xf32>, vector<128x128xf32> -> vector<128x128xf32>
    %11 = vector.broadcast %9 : vector<1x128xf32> to vector<128x128xf32>
    %12 = arith.addf %10, %11 : vector<128x128xf32>
    %cst_11 = arith.constant 0.000000e+00 : f32
    %13 = vector.broadcast %cst_11 : f32 to vector<128x128xf32>
    %14 = arith.maximumf %12, %13 : vector<128x128xf32>
    %c0_12 = arith.constant 0 : index
    %c0_13 = arith.constant 0 : index
    %15 = vector.load %arg6[%c0_12, %c0_13] : memref<128x128xf32, #tpu.memory_space<vmem>>, vector<128x128xf32>
    %c0_14 = arith.constant 0 : index
    %c0_15 = arith.constant 0 : index
    %16 = vector.load %arg7[%c0_14, %c0_15] : memref<1x128xf32, #tpu.memory_space<vmem>>, vector<1x128xf32>
    %cst_16 = arith.constant dense<0.000000e+00> : vector<128x128xf32>
    %17 = tpu.matmul %14, %15, %cst_16 {dimension_numbers = #tpu.dot_dimension_numbers<[1], [0], [0], [1], [0, 0, 1, 1], [], []>} : vector<128x128xf32>, vector<128x128xf32>, vector<128x128xf32> -> vector<128x128xf32>
    %18 = vector.broadcast %16 : vector<1x128xf32> to vector<128x128xf32>
    %19 = arith.addf %17, %18 : vector<128x128xf32>
    %20 = arith.addf %7, %19 : vector<128x128xf32>
    %cst_17 = arith.constant 0.000000e+00 : f32
    %21 = vector.broadcast %cst_17 : f32 to vector<128x128xf32>
    %22 = arith.maximumf %20, %21 : vector<128x128xf32>
    %c0_18 = arith.constant 0 : index
    %c0_19 = arith.constant 0 : index
    %23 = vector.load %arg8[%c0_18, %c0_19] : memref<128x128xf32, #tpu.memory_space<vmem>>, vector<128x128xf32>
    %c0_20 = arith.constant 0 : index
    %c0_21 = arith.constant 0 : index
    %24 = vector.load %arg9[%c0_20, %c0_21] : memref<1x128xf32, #tpu.memory_space<vmem>>, vector<1x128xf32>
    %cst_22 = arith.constant dense<0.000000e+00> : vector<128x128xf32>
    %25 = tpu.matmul %22, %23, %cst_22 {dimension_numbers = #tpu.dot_dimension_numbers<[1], [0], [0], [1], [0, 0, 1, 1], [], []>} : vector<128x128xf32>, vector<128x128xf32>, vector<128x128xf32> -> vector<128x128xf32>
    %26 = vector.broadcast %24 : vector<1x128xf32> to vector<128x128xf32>
    %27 = arith.addf %25, %26 : vector<128x128xf32>
    %cst_23 = arith.constant 0.000000e+00 : f32
    %28 = vector.broadcast %cst_23 : f32 to vector<128x128xf32>
    %29 = arith.maximumf %27, %28 : vector<128x128xf32>
    %c0_24 = arith.constant 0 : index
    %c0_25 = arith.constant 0 : index
    %30 = vector.load %arg10[%c0_24, %c0_25] : memref<128x128xf32, #tpu.memory_space<vmem>>, vector<128x128xf32>
    %cst_26 = arith.constant dense<0.000000e+00> : vector<128x128xf32>
    %31 = tpu.matmul %29, %30, %cst_26 {dimension_numbers = #tpu.dot_dimension_numbers<[1], [0], [0], [1], [0, 0, 1, 1], [], []>} : vector<128x128xf32>, vector<128x128xf32>, vector<128x128xf32> -> vector<128x128xf32>
    %c0_27 = arith.constant 0 : index
    %c0_28 = arith.constant 0 : index
    %32 = vector.load %arg11[%c0_27, %c0_28] : memref<1x128xf32, #tpu.memory_space<vmem>>, vector<1x128xf32>
    %33 = vector.broadcast %32 : vector<1x128xf32> to vector<128x128xf32>
    %34 = arith.addf %31, %33 : vector<128x128xf32>
    %c0_29 = arith.constant 0 : index
    %c0_30 = arith.constant 0 : index
    %35 = vector.load %arg12[%c0_29, %c0_30] : memref<128x128xf32, #tpu.memory_space<vmem>>, vector<128x128xf32>
    tpu.vector_store %arg12[%c0_29, %c0_30], %34 {strides = array<i32>} : memref<128x128xf32, #tpu.memory_space<vmem>>, vector<128x128xf32>,
    return
  }
  func.func @transform_0(%arg0: i32) -> (i32, i32) {
    %c0_i32 = arith.constant 0 : i32
    %c0_i32_0 = arith.constant 0 : i32
    return %arg0, %c0_i32 : i32, i32
  }
  func.func @transform_1(%arg0: i32) -> (i32, i32) {
    %c0_i32 = arith.constant 0 : i32
    %c0_i32_0 = arith.constant 0 : i32
    %c0_i32_1 = arith.constant 0 : i32
    return %c0_i32, %c0_i32_0 : i32, i32
  }
  func.func @transform_2(%arg0: i32) -> (i32, i32) {
    %c0_i32 = arith.constant 0 : i32
    %c0_i32_0 = arith.constant 0 : i32
    %c0_i32_1 = arith.constant 0 : i32
    return %c0_i32, %c0_i32_0 : i32, i32
  }
  func.func @transform_3(%arg0: i32) -> (i32, i32) {
    %c0_i32 = arith.constant 0 : i32
    %c0_i32_0 = arith.constant 0 : i32
    %c0_i32_1 = arith.constant 0 : i32
    return %c0_i32, %c0_i32_0 : i32, i32
  }
  func.func @transform_4(%arg0: i32) -> (i32, i32) {
    %c0_i32 = arith.constant 0 : i32
    %c0_i32_0 = arith.constant 0 : i32
    %c0_i32_1 = arith.constant 0 : i32
    return %c0_i32, %c0_i32_0 : i32, i32
  }
  func.func @transform_5(%arg0: i32) -> (i32, i32) {
    %c0_i32 = arith.constant 0 : i32
    %c0_i32_0 = arith.constant 0 : i32
    %c0_i32_1 = arith.constant 0 : i32
    return %c0_i32, %c0_i32_0 : i32, i32
  }
  func.func @transform_6(%arg0: i32) -> (i32, i32) {
    %c0_i32 = arith.constant 0 : i32
    %c0_i32_0 = arith.constant 0 : i32
    %c0_i32_1 = arith.constant 0 : i32
    return %c0_i32, %c0_i32_0 : i32, i32
  }
  func.func @transform_7(%arg0: i32) -> (i32, i32) {
    %c0_i32 = arith.constant 0 : i32
    %c0_i32_0 = arith.constant 0 : i32
    %c0_i32_1 = arith.constant 0 : i32
    return %c0_i32, %c0_i32_0 : i32, i32
  }
  func.func @transform_8(%arg0: i32) -> (i32, i32) {
    %c0_i32 = arith.constant 0 : i32
    %c0_i32_0 = arith.constant 0 : i32
    %c0_i32_1 = arith.constant 0 : i32
    return %c0_i32, %c0_i32_0 : i32, i32
  }
  func.func @transform_9(%arg0: i32) -> (i32, i32) {
    %c0_i32 = arith.constant 0 : i32
    %c0_i32_0 = arith.constant 0 : i32
    %c0_i32_1 = arith.constant 0 : i32
    return %c0_i32, %c0_i32_0 : i32, i32
  }
  func.func @transform_10(%arg0: i32) -> (i32, i32) {
    %c0_i32 = arith.constant 0 : i32
    %c0_i32_0 = arith.constant 0 : i32
    %c0_i32_1 = arith.constant 0 : i32
    return %c0_i32, %c0_i32_0 : i32, i32
  }
  func.func @transform_11(%arg0: i32) -> (i32, i32) {
    %c0_i32 = arith.constant 0 : i32
    %c0_i32_0 = arith.constant 0 : i32
    return %arg0, %c0_i32 : i32, i32
  }
}

</mosaic_0001>

<llo_original>
// kernel: tpu_custom_call.1
$region0: #{tpu_custom_call.1}
  #allocation0 [shape = 'u32[]', space=smem, size = 0x4, offset = 0x4, fixed_abs, tag = 'smem constant byte address 0x4 - core index']
  #allocation1 [shape = 'u32[72,128]{1,0:T(1,128)}', space=vmem, size = 0x9000, scoped, tag = 'internal scratch']
  %s0 = inlined_call_operand.hbm [shape: f32[256,128], index: 0, kind: input, shape index: {}]
  %s1 = inlined_call_operand.hbm [shape: f32[128,128], index: 1, kind: input, shape index: {}]
  %s2 = inlined_call_operand.vmem [shape: f32[1,128], index: 2, kind: input, shape index: {}]
  %s3 = inlined_call_operand.hbm [shape: f32[128,128], index: 3, kind: input, shape index: {}]
  %s4 = inlined_call_operand.vmem [shape: f32[1,128], index: 4, kind: input, shape index: {}]
  %s5 = inlined_call_operand.hbm [shape: f32[128,128], index: 5, kind: input, shape index: {}]
  %s6 = inlined_call_operand.vmem [shape: f32[1,128], index: 6, kind: input, shape index: {}]
  %s7 = inlined_call_operand.hbm [shape: f32[128,128], index: 7, kind: input, shape index: {}]
  %s8 = inlined_call_operand.vmem [shape: f32[1,128], index: 8, kind: input, shape index: {}]
  %s9 = inlined_call_operand.hbm [shape: f32[128,128], index: 9, kind: input, shape index: {}]
  %s10 = inlined_call_operand.vmem [shape: f32[1,128], index: 10, kind: input, shape index: {}]
  %s11 = inlined_call_operand.hbm [shape: f32[256,128], index: 11, kind: output, shape index: {}]
  %s12 = sld [smem:[#allocation0]]
  $region101: #{tpu_custom_call.1} parent=0
    _
  %s14 = ssub.s32 1, %s12
  %s15 = scalar_select 0, %s14, %s12
  $region1: #{tpu_custom_call.1} parent=0
    #allocation2 [shape = 'u8[131072]{0}', space=vmem, size = 0x20000, scoped, tag = 'input window, operand 0']
    #allocation3 [shape = 's32[2]{0}', space=sflag, size = 0x8, scoped, tag = 'scoped memory for tpu_custom_call.1']
    #allocation4 [shape = 's32[2]{0}', space=sflag, size = 0x8, scoped, tag = 'scoped memory for tpu_custom_call.1']
    #allocation5 [shape = 'u8[65536]{0}', space=vmem, size = 0x10000, scoped, tag = 'input window, operand 1, single buffered']
    #allocation6 [shape = 's32[1]{0}', space=sflag, size = 0x4, scoped, tag = 'scoped memory for tpu_custom_call.1']
    #allocation7 [shape = 'u8[65536]{0}', space=vmem, size = 0x10000, scoped, tag = 'input window, operand 3, single buffered']
    #allocation8 [shape = 'u8[65536]{0}', space=vmem, size = 0x10000, scoped, tag = 'input window, operand 5, single buffered']
    #allocation9 [shape = 's32[1]{0}', space=sflag, size = 0x4, scoped, tag = 'scoped memory for tpu_custom_call.1']
    #allocation10 [shape = 'u8[65536]{0}', space=vmem, size = 0x10000, scoped, tag = 'input window, operand 7, single buffered']
    #allocation11 [shape = 'u8[65536]{0}', space=vmem, size = 0x10000, scoped, tag = 'input window, operand 9, single buffered']
    #allocation12 [shape = 's32[1]{0}', space=sflag, size = 0x4, scoped, tag = 'scoped memory for tpu_custom_call.1']
    #allocation13 [shape = 'u8[131072]{0}', space=vmem, size = 0x20000, scoped, tag = 'output window, operand 0']
    %16 = vsyncpa [#allocation3], 0
    %s17 = scalar_lea.sflag [#allocation3], 1
    %18 = vsyncpa %s17, 0
    %19 = vsyncpa [#allocation6], 0
    %20 = vsyncpa [#allocation9], 0
    %21 = vsyncpa [#allocation12], 0
    %22 = vsyncpa [#allocation4], 0
    %s23 = scalar_lea.sflag [#allocation4], 1
    %24 = vsyncpa %s23, 0
    loop: start=0, step=1, limit=4
    $region2: #{tpu_custom_call.1} parent=1 // loop_pre_header
      _
    $region3: #{tpu_custom_call.1} parent=1 // loop_header
      %s26 = sphi 0, %s30
      %p27 = scmp.ge.s32.totalorder %s26, 4
      %s36 = sphi 0, %s38
      %s39 = sphi 0, %s36
      %s40 = sphi 0, %s39
      %s56 = sphi 0, %s40
      %s60 = sphi 0, %s60
      %s62 = sphi 0, %s60
      %s63 = sphi 0, %s62
      %s77 = sphi 0, %s63
      %s81 = sphi 0, %s81
      %s83 = sphi 0, %s81
      %s84 = sphi 0, %s83
      %s98 = sphi 0, %s84
      %s102 = sphi 0, %s102
      %s104 = sphi 0, %s102
      %s105 = sphi 0, %s104
      %s119 = sphi 0, %s105
      %s123 = sphi 0, %s123
      %s125 = sphi 0, %s123
      %s126 = sphi 0, %s125
      %s140 = sphi 0, %s126
      %s144 = sphi 0, %s144
      %s146 = sphi 0, %s144
      %s147 = sphi 0, %s146
      %s161 = sphi 0, %s147
      %s165 = sphi 0, %s165
      %s167 = sphi 0, %s165
      %s168 = sphi 0, %s167
      %s182 = sphi 0, %s168
      %s186 = sphi 0, %s186
      %s188 = sphi 0, %s186
      %s189 = sphi 0, %s188
      %s203 = sphi 0, %s189
      %s207 = sphi 0, %s207
      %s209 = sphi 0, %s207
      %s210 = sphi 0, %s209
      %s224 = sphi 0, %s210
      %s228 = sphi 0, %s228
      %s230 = sphi 0, %s228
      %s231 = sphi 0, %s230
      %s245 = sphi 0, %s231
      %s249 = sphi 0, %s249
      %s251 = sphi 0, %s249
      %s252 = sphi 0, %s251
      %s266 = sphi 0, %s252
      %s272 = sphi 0, %s274
      %s275 = sphi 0, %s272
      %s276 = sphi 0, %s275
      %s292 = sphi 0, %s276
    $region4: #{tpu_custom_call.1} parent=1 // loop_header_branch
      %29 = sbr.rel (%p27) target = $region8
    $region5: #{tpu_custom_call.1} parent=1 // loop_body
      %s31 = ssub.s32 %s26, 1
      %s32 = ssub.s32 %s26, 2
      %s33 = sadd.s32 %s26, 1
      %s34 = ssub.s32 %s26, %s33
      %p35 = scmp.eq.s32.totalorder %s34, 0
      %s37 = sadd.s32 %s36, 1
      %s38 = scalar_select %p35, %s36, %s37
      %p41 = pneg %p35
      %p42 = scmp.eq.s32.totalorder %s26, 1
      %p43 = por %p41, %p42
      %p44 = scmp.ne.s32.totalorder %s36, %s39
      %p45 = scmp.eq.s32.totalorder %s26, 0
      %p46 = por %p44, %p45
      %p47 = scmp.ne.s32.totalorder %s36, %s39
      %p48 = scmp.eq.s32.totalorder %s31, 1
      %p49 = por %p47, %p48
      %p50 = scmp.ne.s32.totalorder %s39, %s40
      %p51 = scmp.eq.s32.totalorder %s31, 0
      %p52 = por %p50, %p51
      %p53 = scmp.ne.s32.totalorder %s39, %s40
      %p54 = scmp.eq.s32.totalorder %s32, 1
      %p55 = por %p53, %p54
      %p57 = scmp.ne.s32.totalorder %s40, %s56
      %p58 = scmp.eq.s32.totalorder %s32, 0
      %p59 = por %p57, %p58
      %s61 = sadd.s32 %s60, 1
      %p64 = scmp.eq.s32.totalorder %s26, 1
      %p65 = scmp.ne.s32.totalorder %s60, %s62
      %p66 = scmp.eq.s32.totalorder %s26, 0
      %p67 = por %p65, %p66
      %p68 = scmp.ne.s32.totalorder %s60, %s62
      %p69 = scmp.eq.s32.totalorder %s31, 1
      %p70 = por %p68, %p69
      %p71 = scmp.ne.s32.totalorder %s62, %s63
      %p72 = scmp.eq.s32.totalorder %s31, 0
      %p73 = por %p71, %p72
      %p74 = scmp.ne.s32.totalorder %s62, %s63
      %p75 = scmp.eq.s32.totalorder %s32, 1
      %p76 = por %p74, %p75
      %p78 = scmp.ne.s32.totalorder %s63, %s77
      %p79 = scmp.eq.s32.totalorder %s32, 0
      %p80 = por %p78, %p79
      %s82 = sadd.s32 %s81, 1
      %p85 = scmp.eq.s32.totalorder %s26, 1
      %p86 = scmp.ne.s32.totalorder %s81, %s83
      %p87 = scmp.eq.s32.totalorder %s26, 0
      %p88 = por %p86, %p87
      %p89 = scmp.ne.s32.totalorder %s81, %s83
      %p90 = scmp.eq.s32.totalorder %s31, 1
      %p91 = por %p89, %p90
      %p92 = scmp.ne.s32.totalorder %s83, %s84
      %p93 = scmp.eq.s32.totalorder %s31, 0
      %p94 = por %p92, %p93
      %p95 = scmp.ne.s32.totalorder %s83, %s84
      %p96 = scmp.eq.s32.totalorder %s32, 1
      %p97 = por %p95, %p96
      %p99 = scmp.ne.s32.totalorder %s84, %s98
      %p100 = scmp.eq.s32.totalorder %s32, 0
      %p101 = por %p99, %p100
      %s103 = sadd.s32 %s102, 1
      %p106 = scmp.eq.s32.totalorder %s26, 1
      %p107 = scmp.ne.s32.totalorder %s102, %s104
      %p108 = scmp.eq.s32.totalorder %s26, 0
      %p109 = por %p107, %p108
      %p110 = scmp.ne.s32.totalorder %s102, %s104
      %p111 = scmp.eq.s32.totalorder %s31, 1
      %p112 = por %p110, %p111
      %p113 = scmp.ne.s32.totalorder %s104, %s105
      %p114 = scmp.eq.s32.totalorder %s31, 0
      %p115 = por %p113, %p114
      %p116 = scmp.ne.s32.totalorder %s104, %s105
      %p117 = scmp.eq.s32.totalorder %s32, 1
      %p118 = por %p116, %p117
      %p120 = scmp.ne.s32.totalorder %s105, %s119
      %p121 = scmp.eq.s32.totalorder %s32, 0
      %p122 = por %p120, %p121
      %s124 = sadd.s32 %s123, 1
      %p127 = scmp.eq.s32.totalorder %s26, 1
      %p128 = scmp.ne.s32.totalorder %s123, %s125
      %p129 = scmp.eq.s32.totalorder %s26, 0
      %p130 = por %p128, %p129
      %p131 = scmp.ne.s32.totalorder %s123, %s125
      %p132 = scmp.eq.s32.totalorder %s31, 1
      %p133 = por %p131, %p132
      %p134 = scmp.ne.s32.totalorder %s125, %s126
      %p135 = scmp.eq.s32.totalorder %s31, 0
      %p136 = por %p134, %p135
      %p137 = scmp.ne.s32.totalorder %s125, %s126
      %p138 = scmp.eq.s32.totalorder %s32, 1
      %p139 = por %p137, %p138
      %p141 = scmp.ne.s32.totalorder %s126, %s140
      %p142 = scmp.eq.s32.totalorder %s32, 0
      %p143 = por %p141, %p142
      %s145 = sadd.s32 %s144, 1
      %p148 = scmp.eq.s32.totalorder %s26, 1
      %p149 = scmp.ne.s32.totalorder %s144, %s146
      %p150 = scmp.eq.s32.totalorder %s26, 0
      %p151 = por %p149, %p150
      %p152 = scmp.ne.s32.totalorder %s144, %s146
      %p153 = scmp.eq.s32.totalorder %s31, 1
      %p154 = por %p152, %p153
      %p155 = scmp.ne.s32.totalorder %s146, %s147
      %p156 = scmp.eq.s32.totalorder %s31, 0
      %p157 = por %p155, %p156
      %p158 = scmp.ne.s32.totalorder %s146, %s147
      %p159 = scmp.eq.s32.totalorder %s32, 1
      %p160 = por %p158, %p159
      %p162 = scmp.ne.s32.totalorder %s147, %s161
      %p163 = scmp.eq.s32.totalorder %s32, 0
      %p164 = por %p162, %p163
      %s166 = sadd.s32 %s165, 1
      %p169 = scmp.eq.s32.totalorder %s26, 1
      %p170 = scmp.ne.s32.totalorder %s165, %s167
      %p171 = scmp.eq.s32.totalorder %s26, 0
      %p172 = por %p170, %p171
      %p173 = scmp.ne.s32.totalorder %s165, %s167
      %p174 = scmp.eq.s32.totalorder %s31, 1
      %p175 = por %p173, %p174
      %p176 = scmp.ne.s32.totalorder %s167, %s168
      %p177 = scmp.eq.s32.totalorder %s31, 0
      %p178 = por %p176, %p177
      %p179 = scmp.ne.s32.totalorder %s167, %s168
      %p180 = scmp.eq.s32.totalorder %s32, 1
      %p181 = por %p179, %p180
      %p183 = scmp.ne.s32.totalorder %s168, %s182
      %p184 = scmp.eq.s32.totalorder %s32, 0
      %p185 = por %p183, %p184
      %s187 = sadd.s32 %s186, 1
      %p190 = scmp.eq.s32.totalorder %s26, 1
      %p191 = scmp.ne.s32.totalorder %s186, %s188
      %p192 = scmp.eq.s32.totalorder %s26, 0
      %p193 = por %p191, %p192
      %p194 = scmp.ne.s32.totalorder %s186, %s188
      %p195 = scmp.eq.s32.totalorder %s31, 1
      %p196 = por %p194, %p195
      %p197 = scmp.ne.s32.totalorder %s188, %s189
      %p198 = scmp.eq.s32.totalorder %s31, 0
      %p199 = por %p197, %p198
      %p200 = scmp.ne.s32.totalorder %s188, %s189
      %p201 = scmp.eq.s32.totalorder %s32, 1
      %p202 = por %p200, %p201
      %p204 = scmp.ne.s32.totalorder %s189, %s203
      %p205 = scmp.eq.s32.totalorder %s32, 0
      %p206 = por %p204, %p205
      %s208 = sadd.s32 %s207, 1
      %p211 = scmp.eq.s32.totalorder %s26, 1
      %p212 = scmp.ne.s32.totalorder %s207, %s209
      %p213 = scmp.eq.s32.totalorder %s26, 0
      %p214 = por %p212, %p213
      %p215 = scmp.ne.s32.totalorder %s207, %s209
      %p216 = scmp.eq.s32.totalorder %s31, 1
      %p217 = por %p215, %p216
      %p218 = scmp.ne.s32.totalorder %s209, %s210
      %p219 = scmp.eq.s32.totalorder %s31, 0
      %p220 = por %p218, %p219
      %p221 = scmp.ne.s32.totalorder %s209, %s210
      %p222 = scmp.eq.s32.totalorder %s32, 1
      %p223 = por %p221, %p222
      %p225 = scmp.ne.s32.totalorder %s210, %s224
      %p226 = scmp.eq.s32.totalorder %s32, 0
      %p227 = por %p225, %p226
      %s229 = sadd.s32 %s228, 1
      %p232 = scmp.eq.s32.totalorder %s26, 1
      %p233 = scmp.ne.s32.totalorder %s228, %s230
      %p234 = scmp.eq.s32.totalorder %s26, 0
      %p235 = por %p233, %p234
      %p236 = scmp.ne.s32.totalorder %s228, %s230
      %p237 = scmp.eq.s32.totalorder %s31, 1
      %p238 = por %p236, %p237
      %p239 = scmp.ne.s32.totalorder %s230, %s231
      %p240 = scmp.eq.s32.totalorder %s31, 0
      %p241 = por %p239, %p240
      %p242 = scmp.ne.s32.totalorder %s230, %s231
      %p243 = scmp.eq.s32.totalorder %s32, 1
      %p244 = por %p242, %p243
      %p246 = scmp.ne.s32.totalorder %s231, %s245
      %p247 = scmp.eq.s32.totalorder %s32, 0
      %p248 = por %p246, %p247
      %s250 = sadd.s32 %s249, 1
      %p253 = scmp.eq.s32.totalorder %s26, 1
      %p254 = scmp.ne.s32.totalorder %s249, %s251
      %p255 = scmp.eq.s32.totalorder %s26, 0
      %p256 = por %p254, %p255
      %p257 = scmp.ne.s32.totalorder %s249, %s251
      %p258 = scmp.eq.s32.totalorder %s31, 1
      %p259 = por %p257, %p258
      %p260 = scmp.ne.s32.totalorder %s251, %s252
      %p261 = scmp.eq.s32.totalorder %s31, 0
      %p262 = por %p260, %p261
      %p263 = scmp.ne.s32.totalorder %s251, %s252
      %p264 = scmp.eq.s32.totalorder %s32, 1
      %p265 = por %p263, %p264
      %p267 = scmp.ne.s32.totalorder %s252, %s266
      %p268 = scmp.eq.s32.totalorder %s32, 0
      %p269 = por %p267, %p268
      %s270 = ssub.s32 %s26, %s33
      %p271 = scmp.eq.s32.totalorder %s270, 0
      %s273 = sadd.s32 %s272, 1
      %s274 = scalar_select %p271, %s272, %s273
      %p277 = pneg %p271
      %p278 = scmp.eq.s32.totalorder %s26, 1
      %p279 = por %p277, %p278
      %p280 = scmp.ne.s32.totalorder %s272, %s275
      %p281 = scmp.eq.s32.totalorder %s26, 0
      %p282 = por %p280, %p281
      %p283 = scmp.ne.s32.totalorder %s272, %s275
      %p284 = scmp.eq.s32.totalorder %s31, 1
      %p285 = por %p283, %p284
      %p286 = scmp.ne.s32.totalorder %s275, %s276
      %p287 = scmp.eq.s32.totalorder %s31, 0
      %p288 = por %p286, %p287
      %p289 = scmp.ne.s32.totalorder %s275, %s276
      %p290 = scmp.eq.s32.totalorder %s32, 1
      %p291 = por %p289, %p290
      %p293 = scmp.ne.s32.totalorder %s276, %s292
      %p294 = scmp.eq.s32.totalorder %s32, 0
      %p295 = por %p293, %p294
      %p296 = scmp.le.s32.totalorder 1, %s26
      %p297 = scmp.lt.s32.totalorder %s26, 3
      %p298 = pnand %p296, %p297
      %p299 = pneg %p298
      // Predicated region
      $region9: #{tpu_custom_call.1} parent=5 // pred_check
        _
      $region10: #{tpu_custom_call.1} parent=5 // pred_check_branch
        %301 = sbr.rel (%p298) target = $region12
      $region11: #{tpu_custom_call.1} parent=5 // pred_region
        %s302 = ssub.s32 %s26, 1
        // Predicated region
        $region13: #{tpu_custom_call.1} parent=11 // pred_check
          %p303 = pneg %p73
        $region14: #{tpu_custom_call.1} parent=11 // pred_check_branch
          %305 = sbr.rel (%p303) target = $region16
        $region15: #{tpu_custom_call.1} parent=11 // pred_region
          %307 = vsyncadd [#allocation6], 0
          %s308 = sshll.u32 %s1, 4
          %s309 = int_to_ptr.hbm [resolvable:$true] %s308
          %s310 = sshll.u32 [#allocation5], 4
          %s311 = int_to_ptr.vmem [resolvable:$true] %s310
          %316 = dma.hbm_to_vmem [thread:$0]  %s309, 2048, %s311, [#allocation6], 128, 128, 8
        $region16: #{tpu_custom_call.1} parent=11 // pred_fallthru
          _
        // Predicated region
        $region17: #{tpu_custom_call.1} parent=11 // pred_check
          %p317 = pneg %p94
        $region18: #{tpu_custom_call.1} parent=11 // pred_check_branch
          %319 = sbr.rel (%p317) target = $region20
        $region19: #{tpu_custom_call.1} parent=11 // pred_region
          _
        $region20: #{tpu_custom_call.1} parent=11 // pred_fallthru
          _
        // Predicated region
        $region21: #{tpu_custom_call.1} parent=11 // pred_check
          %p320 = pneg %p115
        $region22: #{tpu_custom_call.1} parent=11 // pred_check_branch
          %322 = sbr.rel (%p320) target = $region24
        $region23: #{tpu_custom_call.1} parent=11 // pred_region
          %324 = vsyncadd [#allocation6], 0
          %s325 = sshll.u32 %s3, 4
          %s326 = int_to_ptr.hbm [resolvable:$true] %s325
          %s327 = sshll.u32 [#allocation7], 4
          %s328 = int_to_ptr.vmem [resolvable:$true] %s327
          %333 = dma.hbm_to_vmem [thread:$0]  %s326, 2048, %s328, [#allocation6], 128, 128, 8
        $region24: #{tpu_custom_call.1} parent=11 // pred_fallthru
          _
        // Predicated region
        $region25: #{tpu_custom_call.1} parent=11 // pred_check
          %p334 = pneg %p136
        $region26: #{tpu_custom_call.1} parent=11 // pred_check_branch
          %336 = sbr.rel (%p334) target = $region28
        $region27: #{tpu_custom_call.1} parent=11 // pred_region
          _
        $region28: #{tpu_custom_call.1} parent=11 // pred_fallthru
          _
        // Predicated region
        $region29: #{tpu_custom_call.1} parent=11 // pred_check
          %p337 = pneg %p157
        $region30: #{tpu_custom_call.1} parent=11 // pred_check_branch
          %339 = sbr.rel (%p337) target = $region32
        $region31: #{tpu_custom_call.1} parent=11 // pred_region
          %341 = vsyncadd [#allocation9], 0
          %s342 = sshll.u32 %s5, 4
          %s343 = int_to_ptr.hbm [resolvable:$true] %s342
          %s344 = sshll.u32 [#allocation8], 4
          %s345 = int_to_ptr.vmem [resolvable:$true] %s344
          %350 = dma.hbm_to_vmem [thread:$0]  %s343, 2048, %s345, [#allocation9], 128, 128, 8
        $region32: #{tpu_custom_call.1} parent=11 // pred_fallthru
          _
        // Predicated region
        $region33: #{tpu_custom_call.1} parent=11 // pred_check
          %p351 = pneg %p178
        $region34: #{tpu_custom_call.1} parent=11 // pred_check_branch
          %353 = sbr.rel (%p351) target = $region36
        $region35: #{tpu_custom_call.1} parent=11 // pred_region
          _
        $region36: #{tpu_custom_call.1} parent=11 // pred_fallthru
          _
        // Predicated region
        $region37: #{tpu_custom_call.1} parent=11 // pred_check
          %p354 = pneg %p199
        $region38: #{tpu_custom_call.1} parent=11 // pred_check_branch
          %356 = sbr.rel (%p354) target = $region40
        $region39: #{tpu_custom_call.1} parent=11 // pred_region
          %358 = vsyncadd [#allocation9], 0
          %s359 = sshll.u32 %s7, 4
          %s360 = int_to_ptr.hbm [resolvable:$true] %s359
          %s361 = sshll.u32 [#allocation10], 4
          %s362 = int_to_ptr.vmem [resolvable:$true] %s361
          %367 = dma.hbm_to_vmem [thread:$0]  %s360, 2048, %s362, [#allocation9], 128, 128, 8
        $region40: #{tpu_custom_call.1} parent=11 // pred_fallthru
          _
        // Predicated region
        $region41: #{tpu_custom_call.1} parent=11 // pred_check
          %p368 = pneg %p220
        $region42: #{tpu_custom_call.1} parent=11 // pred_check_branch
          %370 = sbr.rel (%p368) target = $region44
        $region43: #{tpu_custom_call.1} parent=11 // pred_region
          _
        $region44: #{tpu_custom_call.1} parent=11 // pred_fallthru
          _
        // Predicated region
        $region45: #{tpu_custom_call.1} parent=11 // pred_check
          %p371 = pneg %p241
        $region46: #{tpu_custom_call.1} parent=11 // pred_check_branch
          %373 = sbr.rel (%p371) target = $region48
        $region47: #{tpu_custom_call.1} parent=11 // pred_region
          %375 = vsyncadd [#allocation12], 0
          %s376 = sshll.u32 %s9, 4
          %s377 = int_to_ptr.hbm [resolvable:$true] %s376
          %s378 = sshll.u32 [#allocation11], 4
          %s379 = int_to_ptr.vmem [resolvable:$true] %s378
          %384 = dma.hbm_to_vmem [thread:$0]  %s377, 2048, %s379, [#allocation12], 128, 128, 8
        $region48: #{tpu_custom_call.1} parent=11 // pred_fallthru
          _
        // Predicated region
        $region49: #{tpu_custom_call.1} parent=11 // pred_check
          %p385 = pneg %p262
        $region50: #{tpu_custom_call.1} parent=11 // pred_check_branch
          %387 = sbr.rel (%p385) target = $region52
        $region51: #{tpu_custom_call.1} parent=11 // pred_region
          _
        $region52: #{tpu_custom_call.1} parent=11 // pred_fallthru
          _
      $region12: #{tpu_custom_call.1} parent=5 // pred_fallthru
        _
      %p388 = scmp.lt.s32.totalorder %s26, 2
      // Predicated region
      $region53: #{tpu_custom_call.1} parent=5 // pred_check
        %p389 = pneg %p388
      $region54: #{tpu_custom_call.1} parent=5 // pred_check_branch
        %391 = sbr.rel (%p389) target = $region56
      $region55: #{tpu_custom_call.1} parent=5 // pred_region
        // Predicated region
        $region57: #{tpu_custom_call.1} parent=55 // pred_check
          %p392 = pneg %p46
        $region58: #{tpu_custom_call.1} parent=55 // pred_check_branch
          %394 = sbr.rel (%p392) target = $region60
        $region59: #{tpu_custom_call.1} parent=55 // pred_region
          %s395 = sand.u32 %s36, 1
          %s396 = scalar_lea.sflag [#allocation3], %s395
          %s397 = sand.u32 %s36, 1
          %s398 = smul.addr %s397, 128
          %s399 = scalar_lea.vmem [#allocation2], %s398
          %s400 = smul.u32 16, %s26
          %402 = vsyncadd %s396, 0
          %s403 = smul.addr %s400, 8
          %s404 = scalar_lea.hbm %s0, %s403
          %s405 = sshll.u32 %s404, 4
          %s406 = int_to_ptr.hbm [resolvable:$true] %s405
          %s407 = sshll.u32 %s399, 4
          %s408 = int_to_ptr.vmem [resolvable:$true] %s407
          %413 = dma.hbm_to_vmem [thread:$0]  %s406, 2048, %s408, %s396, 128, 128, 8
        $region60: #{tpu_custom_call.1} parent=55 // pred_fallthru
          _
      $region56: #{tpu_custom_call.1} parent=5 // pred_fallthru
        _
      %p414 = scmp.le.s32.totalorder 1, %s26
      %p415 = scmp.lt.s32.totalorder %s26, 3
      %p416 = pnand %p414, %p415
      %p417 = pneg %p416
      // Predicated region
      $region61: #{tpu_custom_call.1} parent=5 // pred_check
        _
      $region62: #{tpu_custom_call.1} parent=5 // pred_check_branch
        %419 = sbr.rel (%p416) target = $region64
      $region63: #{tpu_custom_call.1} parent=5 // pred_region
        %s420 = ssub.s32 %s26, 1
        %s421 = sand.u32 %s39, 1
        %s422 = scalar_lea.sflag [#allocation3], %s421
        %s423 = sand.u32 %s39, 1
        %s424 = smul.addr %s423, 128
        %s425 = scalar_lea.vmem [#allocation2], %s424
        // Predicated region
        $region65: #{tpu_custom_call.1} parent=63 // pred_check
          %p426 = pneg %p52
        $region66: #{tpu_custom_call.1} parent=63 // pred_check_branch
          %428 = sbr.rel (%p426) target = $region68
        $region67: #{tpu_custom_call.1} parent=63 // pred_region
          %430 = dma.done %s422, 2048
        $region68: #{tpu_custom_call.1} parent=63 // pred_fallthru
          _
        // Predicated region
        $region69: #{tpu_custom_call.1} parent=63 // pred_check
          %p431 = pneg %p73
        $region70: #{tpu_custom_call.1} parent=63 // pred_check_branch
          %433 = sbr.rel (%p431) target = $region72
        $region71: #{tpu_custom_call.1} parent=63 // pred_region
          %435 = dma.done [#allocation6], 2048
        $region72: #{tpu_custom_call.1} parent=63 // pred_fallthru
          _
        // Predicated region
        $region73: #{tpu_custom_call.1} parent=63 // pred_check
          %p436 = pneg %p115
        $region74: #{tpu_custom_call.1} parent=63 // pred_check_branch
          %438 = sbr.rel (%p436) target = $region76
        $region75: #{tpu_custom_call.1} parent=63 // pred_region
          %440 = dma.done [#allocation6], 2048
        $region76: #{tpu_custom_call.1} parent=63 // pred_fallthru
          _
        // Predicated region
        $region77: #{tpu_custom_call.1} parent=63 // pred_check
          %p441 = pneg %p157
        $region78: #{tpu_custom_call.1} parent=63 // pred_check_branch
          %443 = sbr.rel (%p441) target = $region80
        $region79: #{tpu_custom_call.1} parent=63 // pred_region
          %445 = dma.done [#allocation9], 2048
        $region80: #{tpu_custom_call.1} parent=63 // pred_fallthru
          _
        // Predicated region
        $region81: #{tpu_custom_call.1} parent=63 // pred_check
          %p446 = pneg %p199
        $region82: #{tpu_custom_call.1} parent=63 // pred_check_branch
          %448 = sbr.rel (%p446) target = $region84
        $region83: #{tpu_custom_call.1} parent=63 // pred_region
          %450 = dma.done [#allocation9], 2048
        $region84: #{tpu_custom_call.1} parent=63 // pred_fallthru
          _
        // Predicated region
        $region85: #{tpu_custom_call.1} parent=63 // pred_check
          %p451 = pneg %p241
        $region86: #{tpu_custom_call.1} parent=63 // pred_check_branch
          %453 = sbr.rel (%p451) target = $region88
        $region87: #{tpu_custom_call.1} parent=63 // pred_region
          %455 = dma.done [#allocation12], 2048
        $region88: #{tpu_custom_call.1} parent=63 // pred_fallthru
          _
        %s456 = sand.u32 %s39, 1
        %s457 = scalar_lea.sflag [#allocation3], %s456
        %s458 = sand.u32 %s39, 1
        %s459 = smul.addr %s458, 128
        %s460 = scalar_lea.vmem [#allocation2], %s459
        %p461 = pneg %p52
        %p462 = pneg %p49
        %p463 = pneg %p73
        %p464 = pneg %p70
        %p465 = pneg %p94
        %p466 = pneg %p91
        %p467 = pneg %p115
        %p468 = pneg %p112
        %p469 = pneg %p136
        %p470 = pneg %p133
        %p471 = pneg %p157
        %p472 = pneg %p154
        %p473 = pneg %p178
        %p474 = pneg %p175
        %p475 = pneg %p199
        %p476 = pneg %p196
        %p477 = pneg %p220
        %p478 = pneg %p217
        %p479 = pneg %p241
        %p480 = pneg %p238
        %p481 = pneg %p262
        %p482 = pneg %p259
        %p483 = pneg %p288
        %p484 = pneg %p285
        %s485 = sand.u32 %s275, 1
        %s486 = scalar_lea.sflag [#allocation4], %s485
        %s487 = sand.u32 %s275, 1
        %s488 = smul.addr %s487, 128
        %s489 = scalar_lea.vmem [#allocation13], %s488
        %s490 = smul.u32 16, %s31
        %s491 = smul.u32 16, %s31
        %v492 = vld [vmem:[%s425] sm:$0xff]
        %v493 = vld [vmem:[%s425 + $0x8] sm:$0xff]
        %v494 = vld [vmem:[%s425 + $0x10] sm:$0xff]
        %v495 = vld [vmem:[%s425 + $0x18] sm:$0xff]
        %v496 = vld [vmem:[%s425 + $0x20] sm:$0xff]
        %v497 = vld [vmem:[%s425 + $0x28] sm:$0xff]
        %v498 = vld [vmem:[%s425 + $0x30] sm:$0xff]
        %v499 = vld [vmem:[%s425 + $0x38] sm:$0xff]
        %v500 = vld [vmem:[%s425 + $0x40] sm:$0xff]
        %v501 = vld [vmem:[%s425 + $0x48] sm:$0xff]
        %v502 = vld [vmem:[%s425 + $0x50] sm:$0xff]
        %v503 = vld [vmem:[%s425 + $0x58] sm:$0xff]
        %v504 = vld [vmem:[%s425 + $0x60] sm:$0xff]
        %v505 = vld [vmem:[%s425 + $0x68] sm:$0xff]
        %v506 = vld [vmem:[%s425 + $0x70] sm:$0xff]
        %v507 = vld [vmem:[%s425 + $0x78] sm:$0xff]
        %v508 = vld [vmem:[#allocation5] sm:$0xff]
        %v509 = vld [vmem:[#allocation5 + $0x8] sm:$0xff]
        %v510 = vld [vmem:[#allocation5 + $0x10] sm:$0xff]
        %v511 = vld [vmem:[#allocation5 + $0x18] sm:$0xff]
        %v512 = vld [vmem:[#allocation5 + $0x20] sm:$0xff]
        %v513 = vld [vmem:[#allocation5 + $0x28] sm:$0xff]
        %v514 = vld [vmem:[#allocation5 + $0x30] sm:$0xff]
        %v515 = vld [vmem:[#allocation5 + $0x38] sm:$0xff]
        %v516 = vld [vmem:[#allocation5 + $0x40] sm:$0xff]
        %v517 = vld [vmem:[#allocation5 + $0x48] sm:$0xff]
        %v518 = vld [vmem:[#allocation5 + $0x50] sm:$0xff]
        %v519 = vld [vmem:[#allocation5 + $0x58] sm:$0xff]
        %v520 = vld [vmem:[#allocation5 + $0x60] sm:$0xff]
        %v521 = vld [vmem:[#allocation5 + $0x68] sm:$0xff]
        %v522 = vld [vmem:[#allocation5 + $0x70] sm:$0xff]
        %v523 = vld [vmem:[#allocation5 + $0x78] sm:$0xff]
        %v524 = vld [vmem:[%s2] sm:$0x1]
        %v526 = vperm.slane %v524, 0
        %528 = vmatpush.msra.mxu0 %v523
        %529 = vmatpush.msra.mxu0 %v522
        %530 = vmatpush.msra.mxu0 %v521
        %531 = vmatpush.msra.mxu0 %v520
        %532 = vmatpush.msra.mxu0 %v519
        %533 = vmatpush.msra.mxu0 %v518
        %534 = vmatpush.msra.mxu0 %v517
        %535 = vmatpush.msra.mxu0 %v516
        %536 = vmatpush.msra.mxu0 %v515
        %537 = vmatpush.msra.mxu0 %v514
        %538 = vmatpush.msra.mxu0 %v513
        %539 = vmatpush.msra.mxu0 %v512
        %540 = vmatpush.msra.mxu0 %v511
        %541 = vmatpush.msra.mxu0 %v510
        %542 = vmatpush.msra.mxu0 %v509
        %543 = vmatpush.msra.mxu0 %v508
        %544 = vmatmul.f32.gmra.mxu0 %v492
        %v545 = vpop.f32.mrf.mxu0
        %v546 = vadd.f32 %v526, %v545
        %547 = vmatmul.f32.gmra.mxu0 %v493
        %v548 = vpop.f32.mrf.mxu0
        %v549 = vadd.f32 %v526, %v548
        %550 = vmatmul.f32.gmra.mxu0 %v494
        %v551 = vpop.f32.mrf.mxu0
        %v552 = vadd.f32 %v526, %v551
        %553 = vmatmul.f32.gmra.mxu0 %v495
        %v554 = vpop.f32.mrf.mxu0
        %v555 = vadd.f32 %v526, %v554
        %556 = vmatmul.f32.gmra.mxu0 %v496
        %v557 = vpop.f32.mrf.mxu0
        %v558 = vadd.f32 %v526, %v557
        %559 = vmatmul.f32.gmra.mxu0 %v497
        %v560 = vpop.f32.mrf.mxu0
        %v561 = vadd.f32 %v526, %v560
        %562 = vmatmul.f32.gmra.mxu0 %v498
        %v563 = vpop.f32.mrf.mxu0
        %v564 = vadd.f32 %v526, %v563
        %565 = vmatmul.f32.gmra.mxu0 %v499
        %v566 = vpop.f32.mrf.mxu0
        %v567 = vadd.f32 %v526, %v566
        %568 = vmatmul.f32.gmra.mxu0 %v500
        %v569 = vpop.f32.mrf.mxu0
        %v570 = vadd.f32 %v526, %v569
        %571 = vmatmul.f32.gmra.mxu0 %v501
        %v572 = vpop.f32.mrf.mxu0
        %v573 = vadd.f32 %v526, %v572
        %574 = vmatmul.f32.gmra.mxu0 %v502
        %v575 = vpop.f32.mrf.mxu0
        %v576 = vadd.f32 %v526, %v575
        %577 = vmatmul.f32.gmra.mxu0 %v503
        %v578 = vpop.f32.mrf.mxu0
        %v579 = vadd.f32 %v526, %v578
        %580 = vmatmul.f32.gmra.mxu0 %v504
        %v581 = vpop.f32.mrf.mxu0
        %v582 = vadd.f32 %v526, %v581
        %583 = vmatmul.f32.gmra.mxu0 %v505
        %v584 = vpop.f32.mrf.mxu0
        %v585 = vadd.f32 %v526, %v584
        %586 = vmatmul.f32.gmra.mxu0 %v506
        %v587 = vpop.f32.mrf.mxu0
        %v588 = vadd.f32 %v526, %v587
        %589 = vmatmul.f32.gmra.mxu0 %v507
        %v590 = vpop.f32.mrf.mxu0
        %v591 = vadd.f32 %v526, %v590
        %592 = vdwg.mxu0
        %v593 = vmax.f32 %v546, 0.0
        %v594 = vmax.f32 %v549, 0.0
        %v595 = vmax.f32 %v552, 0.0
        %v596 = vmax.f32 %v555, 0.0
        %v597 = vmax.f32 %v558, 0.0
        %v598 = vmax.f32 %v561, 0.0
        %v599 = vmax.f32 %v564, 0.0
        %v600 = vmax.f32 %v567, 0.0
        %v601 = vmax.f32 %v570, 0.0
        %v602 = vmax.f32 %v573, 0.0
        %v603 = vmax.f32 %v576, 0.0
        %v604 = vmax.f32 %v579, 0.0
        %v605 = vmax.f32 %v582, 0.0
        %v606 = vmax.f32 %v585, 0.0
        %v607 = vmax.f32 %v588, 0.0
        %v608 = vmax.f32 %v591, 0.0
        %v609 = vld [vmem:[#allocation7] sm:$0xff]
        %v610 = vld [vmem:[#allocation7 + $0x8] sm:$0xff]
        %v611 = vld [vmem:[#allocation7 + $0x10] sm:$0xff]
        %v612 = vld [vmem:[#allocation7 + $0x18] sm:$0xff]
        %v613 = vld [vmem:[#allocation7 + $0x20] sm:$0xff]
        %v614 = vld [vmem:[#allocation7 + $0x28] sm:$0xff]
        %v615 = vld [vmem:[#allocation7 + $0x30] sm:$0xff]
        %v616 = vld [vmem:[#allocation7 + $0x38] sm:$0xff]
        %v617 = vld [vmem:[#allocation7 + $0x40] sm:$0xff]
        %v618 = vld [vmem:[#allocation7 + $0x48] sm:$0xff]
        %v619 = vld [vmem:[#allocation7 + $0x50] sm:$0xff]
        %v620 = vld [vmem:[#allocation7 + $0x58] sm:$0xff]
        %v621 = vld [vmem:[#allocation7 + $0x60] sm:$0xff]
        %v622 = vld [vmem:[#allocation7 + $0x68] sm:$0xff]
        %v623 = vld [vmem:[#allocation7 + $0x70] sm:$0xff]
        %v624 = vld [vmem:[#allocation7 + $0x78] sm:$0xff]
        %v625 = vld [vmem:[%s4] sm:$0x1]
        %v627 = vperm.slane %v625, 0
        %629 = vmatpush.msra.mxu0 %v624
        %630 = vmatpush.msra.mxu0 %v623
        %631 = vmatpush.msra.mxu0 %v622
        %632 = vmatpush.msra.mxu0 %v621
        %633 = vmatpush.msra.mxu0 %v620
        %634 = vmatpush.msra.mxu0 %v619
        %635 = vmatpush.msra.mxu0 %v618
        %636 = vmatpush.msra.mxu0 %v617
        %637 = vmatpush.msra.mxu0 %v616
        %638 = vmatpush.msra.mxu0 %v615
        %639 = vmatpush.msra.mxu0 %v614
        %640 = vmatpush.msra.mxu0 %v613
        %641 = vmatpush.msra.mxu0 %v612
        %642 = vmatpush.msra.mxu0 %v611
        %643 = vmatpush.msra.mxu0 %v610
        %644 = vmatpush.msra.mxu0 %v609
        %645 = vmatmul.f32.gmra.mxu0 %v593
        %v646 = vpop.f32.mrf.mxu0
        %v647 = vadd.f32 %v627, %v646
        %648 = vmatmul.f32.gmra.mxu0 %v594
        %v649 = vpop.f32.mrf.mxu0
        %v650 = vadd.f32 %v627, %v649
        %651 = vmatmul.f32.gmra.mxu0 %v595
        %v652 = vpop.f32.mrf.mxu0
        %v653 = vadd.f32 %v627, %v652
        %654 = vmatmul.f32.gmra.mxu0 %v596
        %v655 = vpop.f32.mrf.mxu0
        %v656 = vadd.f32 %v627, %v655
        %657 = vmatmul.f32.gmra.mxu0 %v597
        %v658 = vpop.f32.mrf.mxu0
        %v659 = vadd.f32 %v627, %v658
        %660 = vmatmul.f32.gmra.mxu0 %v598
        %v661 = vpop.f32.mrf.mxu0
        %v662 = vadd.f32 %v627, %v661
        %663 = vmatmul.f32.gmra.mxu0 %v599
        %v664 = vpop.f32.mrf.mxu0
        %v665 = vadd.f32 %v627, %v664
        %666 = vmatmul.f32.gmra.mxu0 %v600
        %v667 = vpop.f32.mrf.mxu0
        %v668 = vadd.f32 %v627, %v667
        %669 = vmatmul.f32.gmra.mxu0 %v601
        %v670 = vpop.f32.mrf.mxu0
        %v671 = vadd.f32 %v627, %v670
        %672 = vmatmul.f32.gmra.mxu0 %v602
        %v673 = vpop.f32.mrf.mxu0
        %v674 = vadd.f32 %v627, %v673
        %675 = vmatmul.f32.gmra.mxu0 %v603
        %v676 = vpop.f32.mrf.mxu0
        %v677 = vadd.f32 %v627, %v676
        %678 = vmatmul.f32.gmra.mxu0 %v604
        %v679 = vpop.f32.mrf.mxu0
        %v680 = vadd.f32 %v627, %v679
        %681 = vmatmul.f32.gmra.mxu0 %v605
        %v682 = vpop.f32.mrf.mxu0
        %v683 = vadd.f32 %v627, %v682
        %684 = vmatmul.f32.gmra.mxu0 %v606
        %v685 = vpop.f32.mrf.mxu0
        %v686 = vadd.f32 %v627, %v685
        %687 = vmatmul.f32.gmra.mxu0 %v607
        %v688 = vpop.f32.mrf.mxu0
        %v689 = vadd.f32 %v627, %v688
        %690 = vmatmul.f32.gmra.mxu0 %v608
        %v691 = vpop.f32.mrf.mxu0
        %v692 = vadd.f32 %v627, %v691
        %693 = vdwg.mxu0
        %v694 = vmax.f32 %v647, 0.0
        %v695 = vmax.f32 %v650, 0.0
        %v696 = vmax.f32 %v653, 0.0
        %v697 = vmax.f32 %v656, 0.0
        %v698 = vmax.f32 %v659, 0.0
        %v699 = vmax.f32 %v662, 0.0
        %v700 = vmax.f32 %v665, 0.0
        %v701 = vmax.f32 %v668, 0.0
        %v702 = vmax.f32 %v671, 0.0
        %v703 = vmax.f32 %v674, 0.0
        %v704 = vmax.f32 %v677, 0.0
        %v705 = vmax.f32 %v680, 0.0
        %v706 = vmax.f32 %v683, 0.0
        %v707 = vmax.f32 %v686, 0.0
        %v708 = vmax.f32 %v689, 0.0
        %v709 = vmax.f32 %v692, 0.0
        %v710 = vld [vmem:[#allocation8] sm:$0xff]
        %v711 = vld [vmem:[#allocation8 + $0x8] sm:$0xff]
        %v712 = vld [vmem:[#allocation8 + $0x10] sm:$0xff]
        %v713 = vld [vmem:[#allocation8 + $0x18] sm:$0xff]
        %v714 = vld [vmem:[#allocation8 + $0x20] sm:$0xff]
        %v715 = vld [vmem:[#allocation8 + $0x28] sm:$0xff]
        %v716 = vld [vmem:[#allocation8 + $0x30] sm:$0xff]
        %v717 = vld [vmem:[#allocation8 + $0x38] sm:$0xff]
        %v718 = vld [vmem:[#allocation8 + $0x40] sm:$0xff]
        %v719 = vld [vmem:[#allocation8 + $0x48] sm:$0xff]
        %v720 = vld [vmem:[#allocation8 + $0x50] sm:$0xff]
        %v721 = vld [vmem:[#allocation8 + $0x58] sm:$0xff]
        %v722 = vld [vmem:[#allocation8 + $0x60] sm:$0xff]
        %v723 = vld [vmem:[#allocation8 + $0x68] sm:$0xff]
        %v724 = vld [vmem:[#allocation8 + $0x70] sm:$0xff]
        %v725 = vld [vmem:[#allocation8 + $0x78] sm:$0xff]
        %v726 = vld [vmem:[%s6] sm:$0x1]
        %v728 = vperm.slane %v726, 0
        %730 = vmatpush.msra.mxu0 %v725
        %731 = vmatpush.msra.mxu0 %v724
        %732 = vmatpush.msra.mxu0 %v723
        %733 = vmatpush.msra.mxu0 %v722
        %734 = vmatpush.msra.mxu0 %v721
        %735 = vmatpush.msra.mxu0 %v720
        %736 = vmatpush.msra.mxu0 %v719
        %737 = vmatpush.msra.mxu0 %v718
        %738 = vmatpush.msra.mxu0 %v717
        %739 = vmatpush.msra.mxu0 %v716
        %740 = vmatpush.msra.mxu0 %v715
        %741 = vmatpush.msra.mxu0 %v714
        %742 = vmatpush.msra.mxu0 %v713
        %743 = vmatpush.msra.mxu0 %v712
        %744 = vmatpush.msra.mxu0 %v711
        %745 = vmatpush.msra.mxu0 %v710
        %746 = vmatmul.f32.gmra.mxu0 %v694
        %v747 = vpop.f32.mrf.mxu0
        %v748 = vadd.f32 %v728, %v747
        %749 = vmatmul.f32.gmra.mxu0 %v695
        %v750 = vpop.f32.mrf.mxu0
        %v751 = vadd.f32 %v728, %v750
        %752 = vmatmul.f32.gmra.mxu0 %v696
        %v753 = vpop.f32.mrf.mxu0
        %v754 = vadd.f32 %v728, %v753
        %755 = vmatmul.f32.gmra.mxu0 %v697
        %v756 = vpop.f32.mrf.mxu0
        %v757 = vadd.f32 %v728, %v756
        %758 = vmatmul.f32.gmra.mxu0 %v698
        %v759 = vpop.f32.mrf.mxu0
        %v760 = vadd.f32 %v728, %v759
        %761 = vmatmul.f32.gmra.mxu0 %v699
        %v762 = vpop.f32.mrf.mxu0
        %v763 = vadd.f32 %v728, %v762
        %764 = vmatmul.f32.gmra.mxu0 %v700
        %v765 = vpop.f32.mrf.mxu0
        %v766 = vadd.f32 %v728, %v765
        %767 = vmatmul.f32.gmra.mxu0 %v701
        %v768 = vpop.f32.mrf.mxu0
        %v769 = vadd.f32 %v728, %v768
        %770 = vmatmul.f32.gmra.mxu0 %v702
        %v771 = vpop.f32.mrf.mxu0
        %v772 = vadd.f32 %v728, %v771
        %773 = vmatmul.f32.gmra.mxu0 %v703
        %v774 = vpop.f32.mrf.mxu0
        %v775 = vadd.f32 %v728, %v774
        %776 = vmatmul.f32.gmra.mxu0 %v704
        %v777 = vpop.f32.mrf.mxu0
        %v778 = vadd.f32 %v728, %v777
        %779 = vmatmul.f32.gmra.mxu0 %v705
        %v780 = vpop.f32.mrf.mxu0
        %v781 = vadd.f32 %v728, %v780
        %782 = vmatmul.f32.gmra.mxu0 %v706
        %v783 = vpop.f32.mrf.mxu0
        %v784 = vadd.f32 %v728, %v783
        %785 = vmatmul.f32.gmra.mxu0 %v707
        %v786 = vpop.f32.mrf.mxu0
        %v787 = vadd.f32 %v728, %v786
        %788 = vmatmul.f32.gmra.mxu0 %v708
        %v789 = vpop.f32.mrf.mxu0
        %v790 = vadd.f32 %v728, %v789
        %791 = vmatmul.f32.gmra.mxu0 %v709
        %v792 = vpop.f32.mrf.mxu0
        %v793 = vadd.f32 %v728, %v792
        %794 = vdwg.mxu0
        %v795 = vadd.f32 %v593, %v748
        %v796 = vadd.f32 %v594, %v751
        %v797 = vadd.f32 %v595, %v754
        %v798 = vadd.f32 %v596, %v757
        %v799 = vadd.f32 %v597, %v760
        %v800 = vadd.f32 %v598, %v763
        %v801 = vadd.f32 %v599, %v766
        %v802 = vadd.f32 %v600, %v769
        %v803 = vadd.f32 %v601, %v772
        %v804 = vadd.f32 %v602, %v775
        %v805 = vadd.f32 %v603, %v778
        %v806 = vadd.f32 %v604, %v781
        %v807 = vadd.f32 %v605, %v784
        %v808 = vadd.f32 %v606, %v787
        %v809 = vadd.f32 %v607, %v790
        %v810 = vadd.f32 %v608, %v793
        %v811 = vmax.f32 %v795, 0.0
        %v812 = vmax.f32 %v796, 0.0
        %v813 = vmax.f32 %v797, 0.0
        %v814 = vmax.f32 %v798, 0.0
        %v815 = vmax.f32 %v799, 0.0
        %v816 = vmax.f32 %v800, 0.0
        %v817 = vmax.f32 %v801, 0.0
        %v818 = vmax.f32 %v802, 0.0
        %v819 = vmax.f32 %v803, 0.0
        %v820 = vmax.f32 %v804, 0.0
        %v821 = vmax.f32 %v805, 0.0
        %v822 = vmax.f32 %v806, 0.0
        %v823 = vmax.f32 %v807, 0.0
        %v824 = vmax.f32 %v808, 0.0
        %v825 = vmax.f32 %v809, 0.0
        %v826 = vmax.f32 %v810, 0.0
        %v827 = vld [vmem:[#allocation10] sm:$0xff]
        %v828 = vld [vmem:[#allocation10 + $0x8] sm:$0xff]
        %v829 = vld [vmem:[#allocation10 + $0x10] sm:$0xff]
        %v830 = vld [vmem:[#allocation10 + $0x18] sm:$0xff]
        %v831 = vld [vmem:[#allocation10 + $0x20] sm:$0xff]
        %v832 = vld [vmem:[#allocation10 + $0x28] sm:$0xff]
        %v833 = vld [vmem:[#allocation10 + $0x30] sm:$0xff]
        %v834 = vld [vmem:[#allocation10 + $0x38] sm:$0xff]
        %v835 = vld [vmem:[#allocation10 + $0x40] sm:$0xff]
        %v836 = vld [vmem:[#allocation10 + $0x48] sm:$0xff]
        %v837 = vld [vmem:[#allocation10 + $0x50] sm:$0xff]
        %v838 = vld [vmem:[#allocation10 + $0x58] sm:$0xff]
        %v839 = vld [vmem:[#allocation10 + $0x60] sm:$0xff]
        %v840 = vld [vmem:[#allocation10 + $0x68] sm:$0xff]
        %v841 = vld [vmem:[#allocation10 + $0x70] sm:$0xff]
        %v842 = vld [vmem:[#allocation10 + $0x78] sm:$0xff]
        %v843 = vld [vmem:[%s8] sm:$0x1]
        %v845 = vperm.slane %v843, 0
        %847 = vmatpush.msra.mxu0 %v842
        %848 = vmatpush.msra.mxu0 %v841
        %849 = vmatpush.msra.mxu0 %v840
        %850 = vmatpush.msra.mxu0 %v839
        %851 = vmatpush.msra.mxu0 %v838
        %852 = vmatpush.msra.mxu0 %v837
        %853 = vmatpush.msra.mxu0 %v836
        %854 = vmatpush.msra.mxu0 %v835
        %855 = vmatpush.msra.mxu0 %v834
        %856 = vmatpush.msra.mxu0 %v833
        %857 = vmatpush.msra.mxu0 %v832
        %858 = vmatpush.msra.mxu0 %v831
        %859 = vmatpush.msra.mxu0 %v830
        %860 = vmatpush.msra.mxu0 %v829
        %861 = vmatpush.msra.mxu0 %v828
        %862 = vmatpush.msra.mxu0 %v827
        %863 = vmatmul.f32.gmra.mxu0 %v811
        %v864 = vpop.f32.mrf.mxu0
        %v865 = vadd.f32 %v845, %v864
        %866 = vmatmul.f32.gmra.mxu0 %v812
        %v867 = vpop.f32.mrf.mxu0
        %v868 = vadd.f32 %v845, %v867
        %869 = vmatmul.f32.gmra.mxu0 %v813
        %v870 = vpop.f32.mrf.mxu0
        %v871 = vadd.f32 %v845, %v870
        %872 = vmatmul.f32.gmra.mxu0 %v814
        %v873 = vpop.f32.mrf.mxu0
        %v874 = vadd.f32 %v845, %v873
        %875 = vmatmul.f32.gmra.mxu0 %v815
        %v876 = vpop.f32.mrf.mxu0
        %v877 = vadd.f32 %v845, %v876
        %878 = vmatmul.f32.gmra.mxu0 %v816
        %v879 = vpop.f32.mrf.mxu0
        %v880 = vadd.f32 %v845, %v879
        %881 = vmatmul.f32.gmra.mxu0 %v817
        %v882 = vpop.f32.mrf.mxu0
        %v883 = vadd.f32 %v845, %v882
        %884 = vmatmul.f32.gmra.mxu0 %v818
        %v885 = vpop.f32.mrf.mxu0
        %v886 = vadd.f32 %v845, %v885
        %887 = vmatmul.f32.gmra.mxu0 %v819
        %v888 = vpop.f32.mrf.mxu0
        %v889 = vadd.f32 %v845, %v888
        %890 = vmatmul.f32.gmra.mxu0 %v820
        %v891 = vpop.f32.mrf.mxu0
        %v892 = vadd.f32 %v845, %v891
        %893 = vmatmul.f32.gmra.mxu0 %v821
        %v894 = vpop.f32.mrf.mxu0
        %v895 = vadd.f32 %v845, %v894
        %896 = vmatmul.f32.gmra.mxu0 %v822
        %v897 = vpop.f32.mrf.mxu0
        %v898 = vadd.f32 %v845, %v897
        %899 = vmatmul.f32.gmra.mxu0 %v823
        %v900 = vpop.f32.mrf.mxu0
        %v901 = vadd.f32 %v845, %v900
        %902 = vmatmul.f32.gmra.mxu0 %v824
        %v903 = vpop.f32.mrf.mxu0
        %v904 = vadd.f32 %v845, %v903
        %905 = vmatmul.f32.gmra.mxu0 %v825
        %v906 = vpop.f32.mrf.mxu0
        %v907 = vadd.f32 %v845, %v906
        %908 = vmatmul.f32.gmra.mxu0 %v826
        %v909 = vpop.f32.mrf.mxu0
        %v910 = vadd.f32 %v845, %v909
        %911 = vdwg.mxu0
        %v912 = vmax.f32 %v865, 0.0
        %v913 = vmax.f32 %v868, 0.0
        %v914 = vmax.f32 %v871, 0.0
        %v915 = vmax.f32 %v874, 0.0
        %v916 = vmax.f32 %v877, 0.0
        %v917 = vmax.f32 %v880, 0.0
        %v918 = vmax.f32 %v883, 0.0
        %v919 = vmax.f32 %v886, 0.0
        %v920 = vmax.f32 %v889, 0.0
        %v921 = vmax.f32 %v892, 0.0
        %v922 = vmax.f32 %v895, 0.0
        %v923 = vmax.f32 %v898, 0.0
        %v924 = vmax.f32 %v901, 0.0
        %v925 = vmax.f32 %v904, 0.0
        %v926 = vmax.f32 %v907, 0.0
        %v927 = vmax.f32 %v910, 0.0
        %v928 = vld [vmem:[#allocation11] sm:$0xff]
        %v929 = vld [vmem:[#allocation11 + $0x8] sm:$0xff]
        %v930 = vld [vmem:[#allocation11 + $0x10] sm:$0xff]
        %v931 = vld [vmem:[#allocation11 + $0x18] sm:$0xff]
        %v932 = vld [vmem:[#allocation11 + $0x20] sm:$0xff]
        %v933 = vld [vmem:[#allocation11 + $0x28] sm:$0xff]
        %v934 = vld [vmem:[#allocation11 + $0x30] sm:$0xff]
        %v935 = vld [vmem:[#allocation11 + $0x38] sm:$0xff]
        %v936 = vld [vmem:[#allocation11 + $0x40] sm:$0xff]
        %v937 = vld [vmem:[#allocation11 + $0x48] sm:$0xff]
        %v938 = vld [vmem:[#allocation11 + $0x50] sm:$0xff]
        %v939 = vld [vmem:[#allocation11 + $0x58] sm:$0xff]
        %v940 = vld [vmem:[#allocation11 + $0x60] sm:$0xff]
        %v941 = vld [vmem:[#allocation11 + $0x68] sm:$0xff]
        %v942 = vld [vmem:[#allocation11 + $0x70] sm:$0xff]
        %v943 = vld [vmem:[#allocation11 + $0x78] sm:$0xff]
        %v944 = vld [vmem:[%s10] sm:$0x1]
        %v946 = vperm.slane %v944, 0
        %948 = vmatpush.msra.mxu0 %v943
        %949 = vmatpush.msra.mxu0 %v942
        %950 = vmatpush.msra.mxu0 %v941
        %951 = vmatpush.msra.mxu0 %v940
        %952 = vmatpush.msra.mxu0 %v939
        %953 = vmatpush.msra.mxu0 %v938
        %954 = vmatpush.msra.mxu0 %v937
        %955 = vmatpush.msra.mxu0 %v936
        %956 = vmatpush.msra.mxu0 %v935
        %957 = vmatpush.msra.mxu0 %v934
        %958 = vmatpush.msra.mxu0 %v933
        %959 = vmatpush.msra.mxu0 %v932
        %960 = vmatpush.msra.mxu0 %v931
        %961 = vmatpush.msra.mxu0 %v930
        %962 = vmatpush.msra.mxu0 %v929
        %963 = vmatpush.msra.mxu0 %v928
        %964 = vmatmul.f32.gmra.mxu0 %v912
        %v965 = vpop.f32.mrf.mxu0
        %v966 = vadd.f32 %v946, %v965
        %967 = vmatmul.f32.gmra.mxu0 %v913
        %v968 = vpop.f32.mrf.mxu0
        %v969 = vadd.f32 %v946, %v968
        %970 = vmatmul.f32.gmra.mxu0 %v914
        %v971 = vpop.f32.mrf.mxu0
        %v972 = vadd.f32 %v946, %v971
        %973 = vmatmul.f32.gmra.mxu0 %v915
        %v974 = vpop.f32.mrf.mxu0
        %v975 = vadd.f32 %v946, %v974
        %976 = vmatmul.f32.gmra.mxu0 %v916
        %v977 = vpop.f32.mrf.mxu0
        %v978 = vadd.f32 %v946, %v977
        %979 = vmatmul.f32.gmra.mxu0 %v917
        %v980 = vpop.f32.mrf.mxu0
        %v981 = vadd.f32 %v946, %v980
        %982 = vmatmul.f32.gmra.mxu0 %v918
        %v983 = vpop.f32.mrf.mxu0
        %v984 = vadd.f32 %v946, %v983
        %985 = vmatmul.f32.gmra.mxu0 %v919
        %v986 = vpop.f32.mrf.mxu0
        %v987 = vadd.f32 %v946, %v986
        %988 = vmatmul.f32.gmra.mxu0 %v920
        %v989 = vpop.f32.mrf.mxu0
        %v990 = vadd.f32 %v946, %v989
        %991 = vmatmul.f32.gmra.mxu0 %v921
        %v992 = vpop.f32.mrf.mxu0
        %v993 = vadd.f32 %v946, %v992
        %994 = vmatmul.f32.gmra.mxu0 %v922
        %v995 = vpop.f32.mrf.mxu0
        %v996 = vadd.f32 %v946, %v995
        %997 = vmatmul.f32.gmra.mxu0 %v923
        %v998 = vpop.f32.mrf.mxu0
        %v999 = vadd.f32 %v946, %v998
        %1000 = vmatmul.f32.gmra.mxu0 %v924
        %v1001 = vpop.f32.mrf.mxu0
        %v1002 = vadd.f32 %v946, %v1001
        %1003 = vmatmul.f32.gmra.mxu0 %v925
        %v1004 = vpop.f32.mrf.mxu0
        %v1005 = vadd.f32 %v946, %v1004
        %1006 = vmatmul.f32.gmra.mxu0 %v926
        %v1007 = vpop.f32.mrf.mxu0
        %v1008 = vadd.f32 %v946, %v1007
        %1009 = vmatmul.f32.gmra.mxu0 %v927
        %v1010 = vpop.f32.mrf.mxu0
        %v1011 = vadd.f32 %v946, %v1010
        %1012 = vdwg.mxu0
        %1013 = vst [vmem:[%s489] sm:$0xff] %v966
        %1014 = vst [vmem:[%s489 + $0x8] sm:$0xff] %v969
        %1015 = vst [vmem:[%s489 + $0x10] sm:$0xff] %v972
        %1016 = vst [vmem:[%s489 + $0x18] sm:$0xff] %v975
        %1017 = vst [vmem:[%s489 + $0x20] sm:$0xff] %v978
        %1018 = vst [vmem:[%s489 + $0x28] sm:$0xff] %v981
        %1019 = vst [vmem:[%s489 + $0x30] sm:$0xff] %v984
        %1020 = vst [vmem:[%s489 + $0x38] sm:$0xff] %v987
        %1021 = vst [vmem:[%s489 + $0x40] sm:$0xff] %v990
        %1022 = vst [vmem:[%s489 + $0x48] sm:$0xff] %v993
        %1023 = vst [vmem:[%s489 + $0x50] sm:$0xff] %v996
        %1024 = vst [vmem:[%s489 + $0x58] sm:$0xff] %v999
        %1025 = vst [vmem:[%s489 + $0x60] sm:$0xff] %v1002
        %1026 = vst [vmem:[%s489 + $0x68] sm:$0xff] %v1005
        %1027 = vst [vmem:[%s489 + $0x70] sm:$0xff] %v1008
        %1028 = vst [vmem:[%s489 + $0x78] sm:$0xff] %v1011
        %s1029 = sand.u32 %s275, 1
        %s1030 = scalar_lea.sflag [#allocation4], %s1029
        %s1031 = sand.u32 %s275, 1
        %s1032 = smul.addr %s1031, 128
        %s1033 = scalar_lea.vmem [#allocation13], %s1032
        // Predicated region
        $region89: #{tpu_custom_call.1} parent=63 // pred_check
          %p1034 = pneg %p285
        $region90: #{tpu_custom_call.1} parent=63 // pred_check_branch
          %1036 = sbr.rel (%p1034) target = $region92
        $region91: #{tpu_custom_call.1} parent=63 // pred_region
          %s1037 = smul.u32 16, %s31
          %1039 = vsyncadd %s1030, 0
          %s1040 = smul.addr %s1037, 8
          %s1041 = scalar_lea.hbm %s11, %s1040
          %s1042 = sshll.u32 %s1033, 4
          %s1043 = int_to_ptr.vmem [resolvable:$true] %s1042
          %s1044 = sshll.u32 %s1041, 4
          %s1045 = int_to_ptr.hbm [resolvable:$true] %s1044
          %1050 = dma.vmem_to_hbm [thread:$0]  %s1043, 2048, %s1045, %s1030, 128, 128, 8
        $region92: #{tpu_custom_call.1} parent=63 // pred_fallthru
          _
      $region64: #{tpu_custom_call.1} parent=5 // pred_fallthru
        _
      %p1051 = scmp.le.s32.totalorder 2, %s26
      // Predicated region
      $region93: #{tpu_custom_call.1} parent=5 // pred_check
        %p1052 = pneg %p1051
      $region94: #{tpu_custom_call.1} parent=5 // pred_check_branch
        %1054 = sbr.rel (%p1052) target = $region96
      $region95: #{tpu_custom_call.1} parent=5 // pred_region
        %s1055 = ssub.s32 %s26, 2
        // Predicated region
        $region97: #{tpu_custom_call.1} parent=95 // pred_check
          %p1056 = pneg %p291
        $region98: #{tpu_custom_call.1} parent=95 // pred_check_branch
          %1058 = sbr.rel (%p1056) target = $region100
        $region99: #{tpu_custom_call.1} parent=95 // pred_region
          %s1059 = sand.u32 %s276, 1
          %s1060 = scalar_lea.sflag [#allocation4], %s1059
          %s1061 = sand.u32 %s276, 1
          %s1062 = smul.addr %s1061, 128
          %s1063 = scalar_lea.vmem [#allocation13], %s1062
          %1065 = dma.done %s1060, 2048
        $region100: #{tpu_custom_call.1} parent=95 // pred_fallthru
          _
      $region96: #{tpu_custom_call.1} parent=5 // pred_fallthru
        _
    $region6: #{tpu_custom_call.1} parent=1 // loop_footer
      %s30 = sadd.s32 1, %s26
    $region7: #{tpu_custom_call.1} parent=1 // loop_footer_branch
      %25 = sbr.rel target = $region3
    $region8: #{tpu_custom_call.1} parent=1 // loop_exit
      _
    %1066 = vsyncpa [#allocation3], 1
    %s1067 = scalar_lea.sflag [#allocation3], 1
    %1068 = vsyncpa %s1067, 1
    %1069 = vsyncpa [#allocation6], 1
    %1070 = vsyncpa [#allocation9], 1
    %1071 = vsyncpa [#allocation12], 1
    %1072 = vsyncpa [#allocation4], 1
    %s1073 = scalar_lea.sflag [#allocation4], 1
    %1074 = vsyncpa %s1073, 1

</llo_original>
